<compile_context>
chip_gen: v7x
topology: tpu7x:2x2x1
jax: 0.10.0
libtpu: 0.0.40
codegen_flags: <defaults>
</compile_context>

<pallas_src>
import numpy as np
import jax
import jax.numpy as jnp
from jax.experimental import pallas as pl
from jax.experimental.pallas import tpu as pltpu


def _make_kernel(W, N, use_res_connect):
    """N = block_b * H * W (flattened, lane-fused spatial+batch)."""

    def kernel(x_ref, w1_ref, b12_ref, mdw_ref, w3_ref, b3_ref, o_ref):
        x = x_ref[0]                       # (Cin, N): channels on sublanes, fused spatial on lanes
        w1 = w1_ref[...]                   # (hid, Cin)   BN1 scale folded in
        b1 = b12_ref[:, 0:1]               # (hid, 1)
        b2 = b12_ref[:, 1:2]               # (hid, 1)
        w3 = w3_ref[...]                   # (Cout, hid)  BN3 scale folded in
        b3 = b3_ref[...]                   # (Cout, 1)

        # ---- 1x1 expand conv (MXU, f32) + folded-BN bias + ReLU6 ----
        h1 = jnp.dot(w1, x, preferred_element_type=jnp.float32)          # (hid, N)
        h1 = jnp.clip(h1 + b1, 0.0, 6.0)

        # ---- 3x3 depthwise conv, stride 1, pad 1 ----
        # out[c, p] = sum_{i,j} dw[c, 3i+j] * h1[c, p + (i-1)*W + (j-1)]
        # Spatial shifts are lane rotations (XLU slot, ~free).  Out-of-image taps
        # (image borders AND roll wrap across image/slab boundaries) are zeroed by
        # the host-precomputed masked tap weights mdw[k] (hid, N): 1 mul + 1 add
        # per tap on the VALU.
        acc = h1 * mdw_ref[4]                                            # center tap
        for i in range(3):
            for j in range(3):
                if i == 1 and j == 1:
                    continue
                k = i * 3 + j
                s = (i - 1) * W + (j - 1)
                shifted = pltpu.roll(h1, (-s) % N, axis=1)               # shifted[p] = h1[p+s]
                acc = acc + shifted * mdw_ref[k]
        h2 = jnp.clip(acc + b2, 0.0, 6.0)                                # (hid, N)

        # ---- 1x1 project conv (MXU, f32) + folded-BN bias ----
        out = jnp.dot(w3, h2, preferred_element_type=jnp.float32) + b3   # (Cout, N)

        if use_res_connect:                                              # stride==1 and Cin==Cout
            out = out + x

        o_ref[0] = out.astype(o_ref.dtype)

    return kernel


def inverted_residual_pallas(x_nchw, params, *, stride=1, eps=1e-5, block_b=1):
    """Fused InvertedResidual forward.  x_nchw: (B, Cin, H, W) f32 -> (B, Cout, H, W) f32."""
    if stride != 1:
        # TODO(synk): stride=2 branch (strided depthwise, no residual) not implemented.
        raise NotImplementedError("only the stride=1 branch is implemented")
    # TODO(synk): expand_ratio == 1 branch (no expand conv) not wired up.

    B, Cin, H, W = x_nchw.shape
    HW = H * W
    assert B % block_b == 0, "block_b must divide the batch"
    G = B // block_b               # grid steps (keep >= 2 on v7x so both TCs get work)
    N = block_b * HW               # lane-fused width (multiple of 128)

    w1_t = params["w1"]            # (hid, Cin)   torch 1x1 weight, squeezed
    dw_t = params["dw"]            # (hid, 3, 3)  torch depthwise weight, squeezed
    w3_t = params["w3"]            # (Cout, hid)
    hid = w1_t.shape[0]
    Cout = w3_t.shape[0]
    use_res_connect = (stride == 1 and Cin == Cout)

    # ---- fold eval-mode BN into (scale, bias); fold scale into the conv weights ----
    def fold(bn):
        g, b, m, v = bn
        s = g / jnp.sqrt(v + eps)
        return s, b - m * s

    s1, b1 = fold(params["bn1"])
    s2, b2 = fold(params["bn2"])
    s3, b3 = fold(params["bn3"])

    w1 = (w1_t * s1[:, None]).astype(jnp.float32)                    # (hid, Cin)
    dw = (dw_t.reshape(hid, 9) * s2[:, None]).astype(jnp.float32)    # (hid, 9)
    w3 = (w3_t * s3[:, None]).astype(jnp.float32)                    # (Cout, hid)
    b12 = jnp.stack([b1, b2], axis=1).astype(jnp.float32)            # (hid, 2)  packed biases
    b3 = b3[:, None].astype(jnp.float32)                             # (Cout, 1)

    # ---- static 0/1 edge masks for the 9 depthwise taps, tiled over block_b images,
    #      and folded into the tap weights (one mul saved per tap in the hot loop) ----
    rows = np.repeat(np.arange(H), W)
    cols = np.tile(np.arange(W), H)
    masks = np.zeros((9, HW), np.float32)
    for i in range(3):
        for j in range(3):
            ok = ((rows + i - 1 >= 0) & (rows + i - 1 < H) &
                  (cols + j - 1 >= 0) & (cols + j - 1 < W))
            masks[i * 3 + j] = ok
    masks_t = jnp.asarray(np.tile(masks, (1, block_b)))              # (9, N)
    mdw = dw.T[:, :, None] * masks_t[:, None, :]                     # (9, hid, N)  ~ small VMEM

    # ---- layout: (G, Cin, block_b*HW).  For block_b == 1 this is a free reshape of NCHW;
    #      for block_b > 1 it is one cheap host-side transpose so the kernel slab stays
    #      contiguous and lane-dense. ----
    x = (x_nchw.reshape(G, block_b, Cin, HW)
               .transpose(0, 2, 1, 3)
               .reshape(G, Cin, N))

    kernel = _make_kernel(W, N, use_res_connect)

    out = pl.pallas_call(
        kernel,
        out_shape=jax.ShapeDtypeStruct((G, Cout, N), jnp.float32),
        grid=(G,),
        in_specs=[
            pl.BlockSpec((1, Cin, N), lambda g: (g, 0, 0)),          # x (lane-dense slab)
            pl.BlockSpec((hid, Cin), lambda g: (0, 0)),              # w1 (BN1 folded)
            pl.BlockSpec((hid, 2), lambda g: (0, 0)),                # b1 | b2 packed
            pl.BlockSpec((9, hid, N), lambda g: (0, 0, 0)),          # masked depthwise tap weights
            pl.BlockSpec((Cout, hid), lambda g: (0, 0)),             # w3 (BN3 folded)
            pl.BlockSpec((Cout, 1), lambda g: (0, 0)),               # b3
        ],
        out_specs=pl.BlockSpec((1, Cout, N), lambda g: (g, 0, 0)),   # lane-dense output
        compiler_params=pltpu.CompilerParams(
            dimension_semantics=("parallel",)),                      # batch axis -> megacore / 2 TCs
    )(x, w1, b12, mdw, w3, b3)

    # TODO(synk): at production FPN sizes, tile spatially (grid over H with a 1-row halo),
    # size tiles against v7x's 64 MiB VMEM, and do NOT pre-fold masks into mdw there.

    out = (out.reshape(G, Cout, block_b, HW)
              .transpose(0, 2, 1, 3)
              .reshape(B, Cout, H, W))
    return out


def reference(x, params, *, stride=1, eps=1e-5):
    """Pure-JAX NCHW reference mirroring the PyTorch module (eval-mode BN, unfolded)."""
    assert stride == 1

    def bn(y, p):
        g, b, m, v = p
        s = g / jnp.sqrt(v + eps)
        return y * s[None, :, None, None] + (b - m * s)[None, :, None, None]

    B, Cin, H, W = x.shape
    h = jnp.einsum('bchw,dc->bdhw', x, params["w1"])
    h = jnp.clip(bn(h, params["bn1"]), 0.0, 6.0)
    hp = jnp.pad(h, ((0, 0), (0, 0), (1, 1), (1, 1)))
    acc = jnp.zeros_like(h)
    for i in range(3):
        for j in range(3):
            acc = acc + hp[:, :, i:i + H, j:j + W] * params["dw"][None, :, i, j, None, None]
    h2 = jnp.clip(bn(acc, params["bn2"]), 0.0, 6.0)
    out = bn(jnp.einsum('bchw,dc->bdhw', h2, params["w3"]), params["bn3"])
    Cout = out.shape[1]
    if stride == 1 and Cin == Cout:
        out = out + x
    return out


def make_params(key, inp, oup, expand_ratio):
    """Random torch-layout weights + BN stats for the expand_ratio>1, BN=True branch."""
    hid = int(round(inp * expand_ratio))
    ks = jax.random.split(key, 6)
    w1 = 0.1 * jax.random.normal(ks[0], (hid, inp), jnp.float32)     # Conv2d(inp,hid,1) weight
    dw = 0.1 * jax.random.normal(ks[1], (hid, 3, 3), jnp.float32)    # depthwise 3x3 weight
    w3 = 0.1 * jax.random.normal(ks[2], (oup, hid), jnp.float32)     # Conv2d(hid,oup,1) weight

    def bn(k, c):
        k1, k2, k3, k4 = jax.random.split(k, 4)
        gamma = 1.0 + 0.1 * jax.random.normal(k1, (c,), jnp.float32)
        beta = 0.1 * jax.random.normal(k2, (c,), jnp.float32)
        mean = 0.1 * jax.random.normal(k3, (c,), jnp.float32)
        var = 0.5 + jnp.abs(jax.random.normal(k4, (c,), jnp.float32))
        return (gamma, beta, mean, var)

    return dict(w1=w1, dw=dw, w3=w3,
                bn1=bn(ks[3], hid), bn2=bn(ks[4], hid), bn3=bn(ks[5], oup))


if __name__ == "__main__":
    # InvertedResidual(inp=8, oup=8, stride=1, expand_ratio=4): hidden=32, use_res_connect=True.
    B, inp, oup, H, W = 2, 8, 8, 16, 16
    expand_ratio, stride = 4, 1

    key = jax.random.PRNGKey(0)
    kx, kp = jax.random.split(key)
    x = jax.random.normal(kx, (B, inp, H, W), jnp.float32)
    params = make_params(kp, inp, oup, expand_ratio)

    y_ref = reference(x, params, stride=stride)

    # Primary config: block_b=1 -> 2 independent grid steps (keeps both v7x TCs busy at B=2).
    y = jax.block_until_ready(
        inverted_residual_pallas(x, params, stride=stride, block_b=1))
    assert y.shape == (B, oup, H, W)
    assert jnp.allclose(y, y_ref, atol=1e-3, rtol=1e-3), (
        "block_b=1 mismatch vs reference: max abs err "
        f"{float(jnp.max(jnp.abs(y - y_ref)))}")

    # Lane-fused config (what you'd use for big batches on single-TC v5e/v6e):
    y2 = jax.block_until_ready(
        inverted_residual_pallas(x, params, stride=stride, block_b=2))
    assert jnp.allclose(y2, y_ref, atol=1e-3, rtol=1e-3), (
        "block_b=2 (lane-fused) mismatch vs reference: max abs err "
        f"{float(jnp.max(jnp.abs(y2 - y_ref)))}")

    print("KERNEL_OK")
</pallas_src>

<mosaic_0001>
module attributes {stable_mosaic.version = 11 : i64} {
  func.func @kernel(%arg0: i32, %arg1: memref<1x8x256xf32, #tpu.memory_space<vmem>>, %arg2: memref<32x8xf32, #tpu.memory_space<vmem>>, %arg3: memref<32x2xf32, #tpu.memory_space<vmem>>, %arg4: memref<9x32x256xf32, #tpu.memory_space<vmem>>, %arg5: memref<8x32xf32, #tpu.memory_space<vmem>>, %arg6: memref<8x1xf32, #tpu.memory_space<vmem>>, %arg7: memref<1x8x256xf32, #tpu.memory_space<vmem>>) attributes {dimension_semantics = [#tpu.dimension_semantics<parallel>], iteration_bounds = array<i64: 2>, scalar_prefetch = 0 : i64, scratch_operands = 0 : i64, tpu.core_type = #tpu.core_type<tc>, window_params = [{transform_indices = @transform_0, window_bounds = array<i64: 1, 8, 256>}, {pipeline_mode = #tpu.pipeline_mode<synchronous>, transform_indices = @transform_1, window_bounds = array<i64: 32, 8>}, {pipeline_mode = #tpu.pipeline_mode<synchronous>, transform_indices = @transform_2, window_bounds = array<i64: 32, 2>}, {pipeline_mode = #tpu.pipeline_mode<synchronous>, transform_indices = @transform_3, window_bounds = array<i64: 9, 32, 256>}, {pipeline_mode = #tpu.pipeline_mode<synchronous>, transform_indices = @transform_4, window_bounds = array<i64: 8, 32>}, {pipeline_mode = #tpu.pipeline_mode<synchronous>, transform_indices = @transform_5, window_bounds = array<i64: 8, 1>}, {transform_indices = @transform_6, window_bounds = array<i64: 1, 8, 256>}]} {
    %c0 = arith.constant 0 : index
    %c0_0 = arith.constant 0 : index
    %c0_1 = arith.constant 0 : index
    %0 = vector.load %arg1[%c0, %c0_0, %c0_1] : memref<1x8x256xf32, #tpu.memory_space<vmem>>, vector<1x8x256xf32>
    %1 = vector.shape_cast %0 : vector<1x8x256xf32> to vector<8x256xf32>
    %c0_2 = arith.constant 0 : index
    %c0_3 = arith.constant 0 : index
    %2 = vector.load %arg2[%c0_2, %c0_3] : memref<32x8xf32, #tpu.memory_space<vmem>>, vector<32x8xf32>
    %c0_4 = arith.constant 0 : index
    %c0_5 = arith.constant 0 : index
    %3 = vector.load %arg3[%c0_4, %c0_5] : memref<32x2xf32, #tpu.memory_space<vmem>>, vector<32x1xf32>
    %c0_6 = arith.constant 0 : index
    %c1 = arith.constant 1 : index
    %4 = vector.load %arg3[%c0_6, %c1] : memref<32x2xf32, #tpu.memory_space<vmem>>, vector<32x1xf32>
    %c0_7 = arith.constant 0 : index
    %c0_8 = arith.constant 0 : index
    %5 = vector.load %arg5[%c0_7, %c0_8] : memref<8x32xf32, #tpu.memory_space<vmem>>, vector<8x32xf32>
    %c0_9 = arith.constant 0 : index
    %c0_10 = arith.constant 0 : index
    %6 = vector.load %arg6[%c0_9, %c0_10] : memref<8x1xf32, #tpu.memory_space<vmem>>, vector<8x1xf32>
    %cst = arith.constant dense<0.000000e+00> : vector<32x256xf32>
    %7 = tpu.matmul %2, %1, %cst {dimension_numbers = #tpu.dot_dimension_numbers<[1], [0], [0], [1], [0, 0, 1, 1], [], []>} : vector<32x8xf32>, vector<8x256xf32>, vector<32x256xf32> -> vector<32x256xf32>
    %8 = vector.broadcast %3 : vector<32x1xf32> to vector<32x256xf32>
    %9 = arith.addf %7, %8 : vector<32x256xf32>
    %cst_11 = arith.constant 0.000000e+00 : f32
    %cst_12 = arith.constant 6.000000e+00 : f32
    %10 = vector.broadcast %cst_11 : f32 to vector<32x256xf32>
    %11 = arith.maximumf %10, %9 : vector<32x256xf32>
    %12 = vector.broadcast %cst_12 : f32 to vector<32x256xf32>
    %13 = arith.minimumf %12, %11 : vector<32x256xf32>
    %c4 = arith.constant 4 : index
    %c0_13 = arith.constant 0 : index
    %c0_14 = arith.constant 0 : index
    %14 = vector.load %arg4[%c4, %c0_13, %c0_14] : memref<9x32x256xf32, #tpu.memory_space<vmem>>, vector<1x32x256xf32>
    %15 = vector.shape_cast %14 : vector<1x32x256xf32> to vector<32x256xf32>
    %16 = arith.mulf %13, %15 : vector<32x256xf32>
    %c17_i32 = arith.constant 17 : i32
    %17 = tpu.dynamic_rotate %13 by %c17_i32 dim 1 : vector<32x256xf32>, i32 -> vector<32x256xf32>
    %c0_15 = arith.constant 0 : index
    %c0_16 = arith.constant 0 : index
    %c0_17 = arith.constant 0 : index
    %18 = vector.load %arg4[%c0_15, %c0_16, %c0_17] : memref<9x32x256xf32, #tpu.memory_space<vmem>>, vector<1x32x256xf32>
    %19 = vector.shape_cast %18 : vector<1x32x256xf32> to vector<32x256xf32>
    %20 = arith.mulf %17, %19 : vector<32x256xf32>
    %21 = arith.addf %16, %20 : vector<32x256xf32>
    %c16_i32 = arith.constant 16 : i32
    %22 = tpu.dynamic_rotate %13 by %c16_i32 dim 1 : vector<32x256xf32>, i32 -> vector<32x256xf32>
    %c1_18 = arith.constant 1 : index
    %c0_19 = arith.constant 0 : index
    %c0_20 = arith.constant 0 : index
    %23 = vector.load %arg4[%c1_18, %c0_19, %c0_20] : memref<9x32x256xf32, #tpu.memory_space<vmem>>, vector<1x32x256xf32>
    %24 = vector.shape_cast %23 : vector<1x32x256xf32> to vector<32x256xf32>
    %25 = arith.mulf %22, %24 : vector<32x256xf32>
    %26 = arith.addf %21, %25 : vector<32x256xf32>
    %c15_i32 = arith.constant 15 : i32
    %27 = tpu.dynamic_rotate %13 by %c15_i32 dim 1 : vector<32x256xf32>, i32 -> vector<32x256xf32>
    %c2 = arith.constant 2 : index
    %c0_21 = arith.constant 0 : index
    %c0_22 = arith.constant 0 : index
    %28 = vector.load %arg4[%c2, %c0_21, %c0_22] : memref<9x32x256xf32, #tpu.memory_space<vmem>>, vector<1x32x256xf32>
    %29 = vector.shape_cast %28 : vector<1x32x256xf32> to vector<32x256xf32>
    %30 = arith.mulf %27, %29 : vector<32x256xf32>
    %31 = arith.addf %26, %30 : vector<32x256xf32>
    %c1_i32 = arith.constant 1 : i32
    %32 = tpu.dynamic_rotate %13 by %c1_i32 dim 1 : vector<32x256xf32>, i32 -> vector<32x256xf32>
    %c3 = arith.constant 3 : index
    %c0_23 = arith.constant 0 : index
    %c0_24 = arith.constant 0 : index
    %33 = vector.load %arg4[%c3, %c0_23, %c0_24] : memref<9x32x256xf32, #tpu.memory_space<vmem>>, vector<1x32x256xf32>
    %34 = vector.shape_cast %33 : vector<1x32x256xf32> to vector<32x256xf32>
    %35 = arith.mulf %32, %34 : vector<32x256xf32>
    %36 = arith.addf %31, %35 : vector<32x256xf32>
    %c255_i32 = arith.constant 255 : i32
    %37 = tpu.dynamic_rotate %13 by %c255_i32 dim 1 : vector<32x256xf32>, i32 -> vector<32x256xf32>
    %c5 = arith.constant 5 : index
    %c0_25 = arith.constant 0 : index
    %c0_26 = arith.constant 0 : index
    %38 = vector.load %arg4[%c5, %c0_25, %c0_26] : memref<9x32x256xf32, #tpu.memory_space<vmem>>, vector<1x32x256xf32>
    %39 = vector.shape_cast %38 : vector<1x32x256xf32> to vector<32x256xf32>
    %40 = arith.mulf %37, %39 : vector<32x256xf32>
    %41 = arith.addf %36, %40 : vector<32x256xf32>
    %c241_i32 = arith.constant 241 : i32
    %42 = tpu.dynamic_rotate %13 by %c241_i32 dim 1 : vector<32x256xf32>, i32 -> vector<32x256xf32>
    %c6 = arith.constant 6 : index
    %c0_27 = arith.constant 0 : index
    %c0_28 = arith.constant 0 : index
    %43 = vector.load %arg4[%c6, %c0_27, %c0_28] : memref<9x32x256xf32, #tpu.memory_space<vmem>>, vector<1x32x256xf32>
    %44 = vector.shape_cast %43 : vector<1x32x256xf32> to vector<32x256xf32>
    %45 = arith.mulf %42, %44 : vector<32x256xf32>
    %46 = arith.addf %41, %45 : vector<32x256xf32>
    %c240_i32 = arith.constant 240 : i32
    %47 = tpu.dynamic_rotate %13 by %c240_i32 dim 1 : vector<32x256xf32>, i32 -> vector<32x256xf32>
    %c7 = arith.constant 7 : index
    %c0_29 = arith.constant 0 : index
    %c0_30 = arith.constant 0 : index
    %48 = vector.load %arg4[%c7, %c0_29, %c0_30] : memref<9x32x256xf32, #tpu.memory_space<vmem>>, vector<1x32x256xf32>
    %49 = vector.shape_cast %48 : vector<1x32x256xf32> to vector<32x256xf32>
    %50 = arith.mulf %47, %49 : vector<32x256xf32>
    %51 = arith.addf %46, %50 : vector<32x256xf32>
    %c239_i32 = arith.constant 239 : i32
    %52 = tpu.dynamic_rotate %13 by %c239_i32 dim 1 : vector<32x256xf32>, i32 -> vector<32x256xf32>
    %c8 = arith.constant 8 : index
    %c0_31 = arith.constant 0 : index
    %c0_32 = arith.constant 0 : index
    %53 = vector.load %arg4[%c8, %c0_31, %c0_32] : memref<9x32x256xf32, #tpu.memory_space<vmem>>, vector<1x32x256xf32>
    %54 = vector.shape_cast %53 : vector<1x32x256xf32> to vector<32x256xf32>
    %55 = arith.mulf %52, %54 : vector<32x256xf32>
    %56 = arith.addf %51, %55 : vector<32x256xf32>
    %57 = vector.broadcast %4 : vector<32x1xf32> to vector<32x256xf32>
    %58 = arith.addf %56, %57 : vector<32x256xf32>
    %cst_33 = arith.constant 0.000000e+00 : f32
    %cst_34 = arith.constant 6.000000e+00 : f32
    %59 = vector.broadcast %cst_33 : f32 to vector<32x256xf32>
    %60 = arith.maximumf %59, %58 : vector<32x256xf32>
    %61 = vector.broadcast %cst_34 : f32 to vector<32x256xf32>
    %62 = arith.minimumf %61, %60 : vector<32x256xf32>
    %cst_35 = arith.constant dense<0.000000e+00> : vector<8x256xf32>
    %63 = tpu.matmul %5, %62, %cst_35 {dimension_numbers = #tpu.dot_dimension_numbers<[1], [0], [0], [1], [0, 0, 1, 1], [], []>} : vector<8x32xf32>, vector<32x256xf32>, vector<8x256xf32> -> vector<8x256xf32>
    %64 = vector.broadcast %6 : vector<8x1xf32> to vector<8x256xf32>
    %65 = arith.addf %63, %64 : vector<8x256xf32>
    %66 = arith.addf %65, %1 : vector<8x256xf32>
    %c0_36 = arith.constant 0 : index
    %c0_37 = arith.constant 0 : index
    %c0_38 = arith.constant 0 : index
    %67 = vector.load %arg7[%c0_36, %c0_37, %c0_38] : memref<1x8x256xf32, #tpu.memory_space<vmem>>, vector<1x8x256xf32>
    %68 = vector.shape_cast %67 : vector<1x8x256xf32> to vector<8x256xf32>
    %69 = vector.shape_cast %66 : vector<8x256xf32> to vector<1x8x256xf32>
    tpu.vector_store %arg7[%c0_36, %c0_37, %c0_38], %69 {strides = array<i32>} : memref<1x8x256xf32, #tpu.memory_space<vmem>>, vector<1x8x256xf32>,
    return
  }
  func.func @transform_0(%arg0: i32) -> (i32, i32, i32) {
    %c0_i32 = arith.constant 0 : i32
    %c0_i32_0 = arith.constant 0 : i32
    %c0_i32_1 = arith.constant 0 : i32
    return %arg0, %c0_i32, %c0_i32_0 : i32, i32, i32
  }
  func.func @transform_1(%arg0: i32) -> (i32, i32) {
    %c0_i32 = arith.constant 0 : i32
    %c0_i32_0 = arith.constant 0 : i32
    %c0_i32_1 = arith.constant 0 : i32
    return %c0_i32, %c0_i32_0 : i32, i32
  }
  func.func @transform_2(%arg0: i32) -> (i32, i32) {
    %c0_i32 = arith.constant 0 : i32
    %c0_i32_0 = arith.constant 0 : i32
    %c0_i32_1 = arith.constant 0 : i32
    return %c0_i32, %c0_i32_0 : i32, i32
  }
  func.func @transform_3(%arg0: i32) -> (i32, i32, i32) {
    %c0_i32 = arith.constant 0 : i32
    %c0_i32_0 = arith.constant 0 : i32
    %c0_i32_1 = arith.constant 0 : i32
    %c0_i32_2 = arith.constant 0 : i32
    return %c0_i32, %c0_i32_0, %c0_i32_1 : i32, i32, i32
  }
  func.func @transform_4(%arg0: i32) -> (i32, i32) {
    %c0_i32 = arith.constant 0 : i32
    %c0_i32_0 = arith.constant 0 : i32
    %c0_i32_1 = arith.constant 0 : i32
    return %c0_i32, %c0_i32_0 : i32, i32
  }
  func.func @transform_5(%arg0: i32) -> (i32, i32) {
    %c0_i32 = arith.constant 0 : i32
    %c0_i32_0 = arith.constant 0 : i32
    %c0_i32_1 = arith.constant 0 : i32
    return %c0_i32, %c0_i32_0 : i32, i32
  }
  func.func @transform_6(%arg0: i32) -> (i32, i32, i32) {
    %c0_i32 = arith.constant 0 : i32
    %c0_i32_0 = arith.constant 0 : i32
    %c0_i32_1 = arith.constant 0 : i32
    return %arg0, %c0_i32, %c0_i32_0 : i32, i32, i32
  }
}

</mosaic_0001>

<llo_original>
// kernel: tpu_custom_call.1
$region0: #{tpu_custom_call.1}
  #allocation0 [shape = 'u32[]', space=smem, size = 0x4, offset = 0x4, fixed_abs, tag = 'smem constant byte address 0x4 - core index']
  #allocation1 [shape = 'u32[144,128]{1,0:T(1,128)}', space=vmem, size = 0x12000, scoped, tag = 'internal scratch']
  %s0 = inlined_call_operand.vmem [shape: f32[2,8,256], index: 0, kind: input, shape index: {}]
  %s1 = inlined_call_operand.vmem [shape: f32[32,8], index: 1, kind: input, shape index: {}]
  %s2 = inlined_call_operand.vmem [shape: f32[32,2], index: 2, kind: input, shape index: {}]
  %s3 = inlined_call_operand.hbm [shape: f32[9,32,256], index: 3, kind: input, shape index: {}]
  %s4 = inlined_call_operand.vmem [shape: f32[8,32], index: 4, kind: input, shape index: {}]
  %s5 = inlined_call_operand.vmem [shape: f32[8,1], index: 5, kind: input, shape index: {}]
  %s6 = inlined_call_operand.hbm [shape: f32[2,8,256], index: 6, kind: output, shape index: {}]
  %s7 = sld [smem:[#allocation0]]
  $region61: #{tpu_custom_call.1} parent=0
    _
  %s9 = ssub.s32 1, %s7
  %s10 = scalar_select 0, %s9, %s7
  $region1: #{tpu_custom_call.1} parent=0
    #allocation2 [shape = 'u8[294912]{0}', space=vmem, size = 0x48000, scoped, tag = 'input window, operand 3, single buffered']
    #allocation3 [shape = 's32[2]{0}', space=sflag, size = 0x8, scoped, tag = 'scoped memory for tpu_custom_call.1']
    #allocation4 [shape = 's32[2]{0}', space=sflag, size = 0x8, scoped, tag = 'scoped memory for tpu_custom_call.1']
    #allocation5 [shape = 'u8[16384]{0}', space=vmem, size = 0x4000, scoped, tag = 'output window, operand 0']
    %11 = vsyncpa [#allocation3], 0
    %12 = vsyncpa [#allocation4], 0
    %s13 = scalar_lea.sflag [#allocation4], 1
    %14 = vsyncpa %s13, 0
    loop: start=0, step=1, limit=4
    $region2: #{tpu_custom_call.1} parent=1 // loop_pre_header
      _
    $region3: #{tpu_custom_call.1} parent=1 // loop_header
      %s16 = sphi 0, %s20
      %p17 = scmp.ge.s32.totalorder %s16, 4
      %s26 = sphi 0, %s28
      %s29 = sphi 0, %s26
      %s30 = sphi 0, %s29
      %s46 = sphi 0, %s30
      %s50 = sphi 0, %s50
      %s52 = sphi 0, %s50
      %s53 = sphi 0, %s52
      %s67 = sphi 0, %s53
      %s71 = sphi 0, %s71
      %s73 = sphi 0, %s71
      %s74 = sphi 0, %s73
      %s88 = sphi 0, %s74
      %s92 = sphi 0, %s92
      %s94 = sphi 0, %s92
      %s95 = sphi 0, %s94
      %s109 = sphi 0, %s95
      %s113 = sphi 0, %s113
      %s115 = sphi 0, %s113
      %s116 = sphi 0, %s115
      %s130 = sphi 0, %s116
      %s134 = sphi 0, %s134
      %s136 = sphi 0, %s134
      %s137 = sphi 0, %s136
      %s151 = sphi 0, %s137
      %s157 = sphi 0, %s159
      %s160 = sphi 0, %s157
      %s161 = sphi 0, %s160
      %s177 = sphi 0, %s161
    $region4: #{tpu_custom_call.1} parent=1 // loop_header_branch
      %19 = sbr.rel (%p17) target = $region8
    $region5: #{tpu_custom_call.1} parent=1 // loop_body
      %s21 = ssub.s32 %s16, 1
      %s22 = ssub.s32 %s16, 2
      %s23 = sadd.s32 %s16, 1
      %s24 = ssub.s32 %s16, %s23
      %p25 = scmp.eq.s32.totalorder %s24, 0
      %s27 = sadd.s32 %s26, 1
      %s28 = scalar_select %p25, %s26, %s27
      %p31 = pneg %p25
      %p32 = scmp.eq.s32.totalorder %s16, 1
      %p33 = por %p31, %p32
      %p34 = scmp.ne.s32.totalorder %s26, %s29
      %p35 = scmp.eq.s32.totalorder %s16, 0
      %p36 = por %p34, %p35
      %p37 = scmp.ne.s32.totalorder %s26, %s29
      %p38 = scmp.eq.s32.totalorder %s21, 1
      %p39 = por %p37, %p38
      %p40 = scmp.ne.s32.totalorder %s29, %s30
      %p41 = scmp.eq.s32.totalorder %s21, 0
      %p42 = por %p40, %p41
      %p43 = scmp.ne.s32.totalorder %s29, %s30
      %p44 = scmp.eq.s32.totalorder %s22, 1
      %p45 = por %p43, %p44
      %p47 = scmp.ne.s32.totalorder %s30, %s46
      %p48 = scmp.eq.s32.totalorder %s22, 0
      %p49 = por %p47, %p48
      %s51 = sadd.s32 %s50, 1
      %p54 = scmp.eq.s32.totalorder %s16, 1
      %p55 = scmp.ne.s32.totalorder %s50, %s52
      %p56 = scmp.eq.s32.totalorder %s16, 0
      %p57 = por %p55, %p56
      %p58 = scmp.ne.s32.totalorder %s50, %s52
      %p59 = scmp.eq.s32.totalorder %s21, 1
      %p60 = por %p58, %p59
      %p61 = scmp.ne.s32.totalorder %s52, %s53
      %p62 = scmp.eq.s32.totalorder %s21, 0
      %p63 = por %p61, %p62
      %p64 = scmp.ne.s32.totalorder %s52, %s53
      %p65 = scmp.eq.s32.totalorder %s22, 1
      %p66 = por %p64, %p65
      %p68 = scmp.ne.s32.totalorder %s53, %s67
      %p69 = scmp.eq.s32.totalorder %s22, 0
      %p70 = por %p68, %p69
      %s72 = sadd.s32 %s71, 1
      %p75 = scmp.eq.s32.totalorder %s16, 1
      %p76 = scmp.ne.s32.totalorder %s71, %s73
      %p77 = scmp.eq.s32.totalorder %s16, 0
      %p78 = por %p76, %p77
      %p79 = scmp.ne.s32.totalorder %s71, %s73
      %p80 = scmp.eq.s32.totalorder %s21, 1
      %p81 = por %p79, %p80
      %p82 = scmp.ne.s32.totalorder %s73, %s74
      %p83 = scmp.eq.s32.totalorder %s21, 0
      %p84 = por %p82, %p83
      %p85 = scmp.ne.s32.totalorder %s73, %s74
      %p86 = scmp.eq.s32.totalorder %s22, 1
      %p87 = por %p85, %p86
      %p89 = scmp.ne.s32.totalorder %s74, %s88
      %p90 = scmp.eq.s32.totalorder %s22, 0
      %p91 = por %p89, %p90
      %s93 = sadd.s32 %s92, 1
      %p96 = scmp.eq.s32.totalorder %s16, 1
      %p97 = scmp.ne.s32.totalorder %s92, %s94
      %p98 = scmp.eq.s32.totalorder %s16, 0
      %p99 = por %p97, %p98
      %p100 = scmp.ne.s32.totalorder %s92, %s94
      %p101 = scmp.eq.s32.totalorder %s21, 1
      %p102 = por %p100, %p101
      %p103 = scmp.ne.s32.totalorder %s94, %s95
      %p104 = scmp.eq.s32.totalorder %s21, 0
      %p105 = por %p103, %p104
      %p106 = scmp.ne.s32.totalorder %s94, %s95
      %p107 = scmp.eq.s32.totalorder %s22, 1
      %p108 = por %p106, %p107
      %p110 = scmp.ne.s32.totalorder %s95, %s109
      %p111 = scmp.eq.s32.totalorder %s22, 0
      %p112 = por %p110, %p111
      %s114 = sadd.s32 %s113, 1
      %p117 = scmp.eq.s32.totalorder %s16, 1
      %p118 = scmp.ne.s32.totalorder %s113, %s115
      %p119 = scmp.eq.s32.totalorder %s16, 0
      %p120 = por %p118, %p119
      %p121 = scmp.ne.s32.totalorder %s113, %s115
      %p122 = scmp.eq.s32.totalorder %s21, 1
      %p123 = por %p121, %p122
      %p124 = scmp.ne.s32.totalorder %s115, %s116
      %p125 = scmp.eq.s32.totalorder %s21, 0
      %p126 = por %p124, %p125
      %p127 = scmp.ne.s32.totalorder %s115, %s116
      %p128 = scmp.eq.s32.totalorder %s22, 1
      %p129 = por %p127, %p128
      %p131 = scmp.ne.s32.totalorder %s116, %s130
      %p132 = scmp.eq.s32.totalorder %s22, 0
      %p133 = por %p131, %p132
      %s135 = sadd.s32 %s134, 1
      %p138 = scmp.eq.s32.totalorder %s16, 1
      %p139 = scmp.ne.s32.totalorder %s134, %s136
      %p140 = scmp.eq.s32.totalorder %s16, 0
      %p141 = por %p139, %p140
      %p142 = scmp.ne.s32.totalorder %s134, %s136
      %p143 = scmp.eq.s32.totalorder %s21, 1
      %p144 = por %p142, %p143
      %p145 = scmp.ne.s32.totalorder %s136, %s137
      %p146 = scmp.eq.s32.totalorder %s21, 0
      %p147 = por %p145, %p146
      %p148 = scmp.ne.s32.totalorder %s136, %s137
      %p149 = scmp.eq.s32.totalorder %s22, 1
      %p150 = por %p148, %p149
      %p152 = scmp.ne.s32.totalorder %s137, %s151
      %p153 = scmp.eq.s32.totalorder %s22, 0
      %p154 = por %p152, %p153
      %s155 = ssub.s32 %s16, %s23
      %p156 = scmp.eq.s32.totalorder %s155, 0
      %s158 = sadd.s32 %s157, 1
      %s159 = scalar_select %p156, %s157, %s158
      %p162 = pneg %p156
      %p163 = scmp.eq.s32.totalorder %s16, 1
      %p164 = por %p162, %p163
      %p165 = scmp.ne.s32.totalorder %s157, %s160
      %p166 = scmp.eq.s32.totalorder %s16, 0
      %p167 = por %p165, %p166
      %p168 = scmp.ne.s32.totalorder %s157, %s160
      %p169 = scmp.eq.s32.totalorder %s21, 1
      %p170 = por %p168, %p169
      %p171 = scmp.ne.s32.totalorder %s160, %s161
      %p172 = scmp.eq.s32.totalorder %s21, 0
      %p173 = por %p171, %p172
      %p174 = scmp.ne.s32.totalorder %s160, %s161
      %p175 = scmp.eq.s32.totalorder %s22, 1
      %p176 = por %p174, %p175
      %p178 = scmp.ne.s32.totalorder %s161, %s177
      %p179 = scmp.eq.s32.totalorder %s22, 0
      %p180 = por %p178, %p179
      %p181 = scmp.le.s32.totalorder 1, %s16
      %p182 = scmp.lt.s32.totalorder %s16, 3
      %p183 = pnand %p181, %p182
      %p184 = pneg %p183
      // Predicated region
      $region9: #{tpu_custom_call.1} parent=5 // pred_check
        _
      $region10: #{tpu_custom_call.1} parent=5 // pred_check_branch
        %186 = sbr.rel (%p183) target = $region12
      $region11: #{tpu_custom_call.1} parent=5 // pred_region
        %s187 = ssub.s32 %s16, 1
        // Predicated region
        $region13: #{tpu_custom_call.1} parent=11 // pred_check
          %p188 = pneg %p63
        $region14: #{tpu_custom_call.1} parent=11 // pred_check_branch
          %190 = sbr.rel (%p188) target = $region16
        $region15: #{tpu_custom_call.1} parent=11 // pred_region
          _
        $region16: #{tpu_custom_call.1} parent=11 // pred_fallthru
          _
        // Predicated region
        $region17: #{tpu_custom_call.1} parent=11 // pred_check
          %p191 = pneg %p84
        $region18: #{tpu_custom_call.1} parent=11 // pred_check_branch
          %193 = sbr.rel (%p191) target = $region20
        $region19: #{tpu_custom_call.1} parent=11 // pred_region
          _
        $region20: #{tpu_custom_call.1} parent=11 // pred_fallthru
          _
        // Predicated region
        $region21: #{tpu_custom_call.1} parent=11 // pred_check
          %p194 = pneg %p105
        $region22: #{tpu_custom_call.1} parent=11 // pred_check_branch
          %196 = sbr.rel (%p194) target = $region24
        $region23: #{tpu_custom_call.1} parent=11 // pred_region
          %s198 = ssub.s32 9216, 9216
          %199 = vsyncadd [#allocation3], %s198
          %s200 = sshll.u32 [#allocation2], 4
          %s201 = int_to_ptr.vmem [resolvable:$true] %s200
          %206 = dma.hbm_to_vmem [thread:$0]  %s3, 9216, %s201, [#allocation3], 256, 256, 16
        $region24: #{tpu_custom_call.1} parent=11 // pred_fallthru
          _
        // Predicated region
        $region25: #{tpu_custom_call.1} parent=11 // pred_check
          %p207 = pneg %p126
        $region26: #{tpu_custom_call.1} parent=11 // pred_check_branch
          %209 = sbr.rel (%p207) target = $region28
        $region27: #{tpu_custom_call.1} parent=11 // pred_region
          _
        $region28: #{tpu_custom_call.1} parent=11 // pred_fallthru
          _
        // Predicated region
        $region29: #{tpu_custom_call.1} parent=11 // pred_check
          %p210 = pneg %p147
        $region30: #{tpu_custom_call.1} parent=11 // pred_check_branch
          %212 = sbr.rel (%p210) target = $region32
        $region31: #{tpu_custom_call.1} parent=11 // pred_region
          _
        $region32: #{tpu_custom_call.1} parent=11 // pred_fallthru
          _
      $region12: #{tpu_custom_call.1} parent=5 // pred_fallthru
        _
      %p213 = scmp.lt.s32.totalorder %s16, 2
      // Predicated region
      $region33: #{tpu_custom_call.1} parent=5 // pred_check
        %p214 = pneg %p213
      $region34: #{tpu_custom_call.1} parent=5 // pred_check_branch
        %216 = sbr.rel (%p214) target = $region36
      $region35: #{tpu_custom_call.1} parent=5 // pred_region
        // Predicated region
        $region37: #{tpu_custom_call.1} parent=35 // pred_check
          %p217 = pneg %p36
        $region38: #{tpu_custom_call.1} parent=35 // pred_check_branch
          %219 = sbr.rel (%p217) target = $region40
        $region39: #{tpu_custom_call.1} parent=35 // pred_region
          %p220 = scmp.lt.s32.totalorder %s16, 1
          %s221 = scalar_select %p220, %s16, 1
          %s222 = smul.addr %s221, 2
          %s223 = smul.addr %s222, 8
          %s224 = scalar_lea.vmem %s0, %s223
        $region40: #{tpu_custom_call.1} parent=35 // pred_fallthru
          _
      $region36: #{tpu_custom_call.1} parent=5 // pred_fallthru
        _
      %p225 = scmp.le.s32.totalorder 1, %s16
      %p226 = scmp.lt.s32.totalorder %s16, 3
      %p227 = pnand %p225, %p226
      %p228 = pneg %p227
      // Predicated region
      $region41: #{tpu_custom_call.1} parent=5 // pred_check
        _
      $region42: #{tpu_custom_call.1} parent=5 // pred_check_branch
        %230 = sbr.rel (%p227) target = $region44
      $region43: #{tpu_custom_call.1} parent=5 // pred_region
        %s231 = ssub.s32 %s16, 1
        // Predicated region
        $region45: #{tpu_custom_call.1} parent=43 // pred_check
          %p232 = pneg %p105
        $region46: #{tpu_custom_call.1} parent=43 // pred_check_branch
          %234 = sbr.rel (%p232) target = $region48
        $region47: #{tpu_custom_call.1} parent=43 // pred_region
          %235 = dma.done [#allocation3], 9216
        $region48: #{tpu_custom_call.1} parent=43 // pred_fallthru
          _
        %p236 = scmp.lt.s32.totalorder %s21, 1
        %s237 = scalar_select %p236, %s21, 1
        %s238 = smul.addr %s237, 2
        %s239 = smul.addr %s238, 8
        %s240 = scalar_lea.vmem %s0, %s239
        %p241 = pneg %p42
        %p242 = pneg %p39
        %p243 = pneg %p63
        %p244 = pneg %p60
        %p245 = pneg %p84
        %p246 = pneg %p81
        %p247 = pneg %p105
        %p248 = pneg %p102
        %p249 = pneg %p126
        %p250 = pneg %p123
        %p251 = pneg %p147
        %p252 = pneg %p144
        %p253 = pneg %p173
        %p254 = pneg %p170
        %s255 = sand.u32 %s160, 1
        %s256 = scalar_lea.sflag [#allocation4], %s255
        %s257 = sand.u32 %s160, 1
        %s258 = smul.addr %s257, 16
        %s259 = scalar_lea.vmem [#allocation5], %s258
        %p260 = scmp.lt.s32.totalorder %s21, 1
        %s261 = scalar_select %p260, %s21, 1
        %s262 = smul.addr %s261, 2
        %s263 = smul.addr %s262, 8
        %s264 = scalar_lea.vmem %s0, %s263
        %v265 = vld [vmem:[%s264] sm:$0xff]
        %v266 = vld [vmem:[%s264 + $0x8] sm:$0xff]
        %v267 = vld [vmem:[%s1] sm:$0xff]
        %v268 = vld [vmem:[%s1 + $0x8] sm:$0xff]
        %v269 = vld [vmem:[%s1 + $0x10] sm:$0xff]
        %v270 = vld [vmem:[%s1 + $0x18] sm:$0xff]
        %v271 = vld [vmem:[%s2] sm:$0xff]
        %v272 = vld [vmem:[%s2 + $0x8] sm:$0xff]
        %v273 = vld [vmem:[%s2 + $0x10] sm:$0xff]
        %v274 = vld [vmem:[%s2 + $0x18] sm:$0xff]
        %v275 = vld [vmem:[%s4] sm:$0xff]
        %v276 = vld [vmem:[%s5] sm:$0xff]
        %278 = vset.pattern.permute.xlu0 0
        %279 = vperm.xlu0 %278, %v271
        %v280 = vpop.permute.xlu0 %279
        %283 = vset.pattern.permute.xlu0 0
        %284 = vperm.xlu0 %283, %v272
        %v285 = vpop.permute.xlu0 %284
        %288 = vset.pattern.permute.xlu0 0
        %289 = vperm.xlu0 %288, %v273
        %v290 = vpop.permute.xlu0 %289
        %293 = vset.pattern.permute.xlu0 0
        %294 = vperm.xlu0 %293, %v274
        %v295 = vpop.permute.xlu0 %294
        %vm297 = vcmask 64512
        %v299 = vsel %vm297, %v267, 0
        %v302 = vsel %vm297, %v268, 0
        %v305 = vsel %vm297, %v269, 0
        %v308 = vsel %vm297, %v270, 0
        %310 = vmatprep.subr.mxu0 %v266
        %311 = vmatpush1.msra.mxu0 %v265
        %312 = vmatprep.subr.mxu0 0.0
        %313 = vmatpush1.msra.mxu0 0.0
        %314 = vmatprep.subr.mxu0 0.0
        %315 = vmatpush1.msra.mxu0 0.0
        %316 = vmatprep.subr.mxu0 0.0
        %317 = vmatpush1.msra.mxu0 0.0
        %318 = vmatprep.subr.mxu0 0.0
        %319 = vmatpush1.msra.mxu0 0.0
        %320 = vmatprep.subr.mxu0 0.0
        %321 = vmatpush1.msra.mxu0 0.0
        %322 = vmatprep.subr.mxu0 0.0
        %323 = vmatpush1.msra.mxu0 0.0
        %324 = vmatprep.subr.mxu0 0.0
        %325 = vmatpush1.msra.mxu0 0.0
        %326 = vmatprep.subr.mxu0 0.0
        %327 = vmatpush1.msra.mxu0 0.0
        %328 = vmatprep.subr.mxu0 0.0
        %329 = vmatpush1.msra.mxu0 0.0
        %330 = vmatprep.subr.mxu0 0.0
        %331 = vmatpush1.msra.mxu0 0.0
        %332 = vmatprep.subr.mxu0 0.0
        %333 = vmatpush1.msra.mxu0 0.0
        %334 = vmatprep.subr.mxu0 0.0
        %335 = vmatpush1.msra.mxu0 0.0
        %336 = vmatprep.subr.mxu0 0.0
        %337 = vmatpush1.msra.mxu0 0.0
        %338 = vmatprep.subr.mxu0 0.0
        %339 = vmatpush1.msra.mxu0 0.0
        %340 = vmatprep.subr.mxu0 0.0
        %341 = vmatpush1.msra.mxu0 0.0
        %342 = vmatprep.subr.mxu0 0.0
        %343 = vmatpush1.msra.mxu0 0.0
        %344 = vmatprep.subr.mxu0 0.0
        %345 = vmatpush1.msra.mxu0 0.0
        %346 = vmatprep.subr.mxu0 0.0
        %347 = vmatpush1.msra.mxu0 0.0
        %348 = vmatprep.subr.mxu0 0.0
        %349 = vmatpush1.msra.mxu0 0.0
        %350 = vmatprep.subr.mxu0 0.0
        %351 = vmatpush1.msra.mxu0 0.0
        %352 = vmatprep.subr.mxu0 0.0
        %353 = vmatpush1.msra.mxu0 0.0
        %354 = vmatprep.subr.mxu0 0.0
        %355 = vmatpush1.msra.mxu0 0.0
        %356 = vmatprep.subr.mxu0 0.0
        %357 = vmatpush1.msra.mxu0 0.0
        %358 = vmatprep.subr.mxu0 0.0
        %359 = vmatpush1.msra.mxu0 0.0
        %360 = vmatprep.subr.mxu0 0.0
        %361 = vmatpush1.msra.mxu0 0.0
        %362 = vmatprep.subr.mxu0 0.0
        %363 = vmatpush1.msra.mxu0 0.0
        %364 = vmatprep.subr.mxu0 0.0
        %365 = vmatpush1.msra.mxu0 0.0
        %366 = vmatprep.subr.mxu0 0.0
        %367 = vmatpush1.msra.mxu0 0.0
        %368 = vmatprep.subr.mxu0 0.0
        %369 = vmatpush1.msra.mxu0 0.0
        %370 = vmatprep.subr.mxu0 0.0
        %371 = vmatpush1.msra.mxu0 0.0
        %372 = vmatprep.subr.mxu0 0.0
        %373 = vmatpush1.msra.mxu0 0.0
        %374 = vmatprep.mubr.f32.mxu0 0.0
        %375 = vmatmul.mubr.f32.gmra.mrb[0].mxu0 %v299
        %v376 = vpop.f32.mrb[0].mxu0
        %v377 = vadd.f32 %v280, %v376
        %v378 = vpop.f32.mrb[0].mxu0
        %v379 = vadd.f32 %v280, %v378
        %380 = vmatprep.mubr.f32.mxu0 0.0
        %381 = vmatmul.mubr.f32.gmra.mrb[0].mxu0 %v302
        %v382 = vpop.f32.mrb[0].mxu0
        %v383 = vadd.f32 %v285, %v382
        %v384 = vpop.f32.mrb[0].mxu0
        %v385 = vadd.f32 %v285, %v384
        %386 = vmatprep.mubr.f32.mxu0 0.0
        %387 = vmatmul.mubr.f32.gmra.mrb[0].mxu0 %v305
        %v388 = vpop.f32.mrb[0].mxu0
        %v389 = vadd.f32 %v290, %v388
        %v390 = vpop.f32.mrb[0].mxu0
        %v391 = vadd.f32 %v290, %v390
        %392 = vmatprep.mubr.f32.mxu0 0.0
        %393 = vmatmul.mubr.f32.gmra.mrb[0].mxu0 %v308
        %v394 = vpop.f32.mrb[0].mxu0
        %v395 = vadd.f32 %v295, %v394
        %v396 = vpop.f32.mrb[0].mxu0
        %v397 = vadd.f32 %v295, %v396
        %398 = vdwg.mxu0
        %v399 = vmax.f32 %v377, 0.0
        %v400 = vmax.f32 %v379, 0.0
        %v401 = vmax.f32 %v383, 0.0
        %v402 = vmax.f32 %v385, 0.0
        %v403 = vmax.f32 %v389, 0.0
        %v404 = vmax.f32 %v391, 0.0
        %v405 = vmax.f32 %v395, 0.0
        %v406 = vmax.f32 %v397, 0.0
        %v407 = vmin.f32 %v399, 6.0
        %v408 = vmin.f32 %v400, 6.0
        %v409 = vmin.f32 %v401, 6.0
        %v410 = vmin.f32 %v402, 6.0
        %v411 = vmin.f32 %v403, 6.0
        %v412 = vmin.f32 %v404, 6.0
        %v413 = vmin.f32 %v405, 6.0
        %v414 = vmin.f32 %v406, 6.0
        %s415 = scalar_lea.vmem [#allocation2], 256
        %v416 = vld [vmem:[%s415] sm:$0xff]
        %v417 = vld [vmem:[%s415 + $0x8] sm:$0xff]
        %v418 = vld [vmem:[%s415 + $0x10] sm:$0xff]
        %v419 = vld [vmem:[%s415 + $0x18] sm:$0xff]
        %v420 = vld [vmem:[%s415 + $0x20] sm:$0xff]
        %v421 = vld [vmem:[%s415 + $0x28] sm:$0xff]
        %v422 = vld [vmem:[%s415 + $0x30] sm:$0xff]
        %v423 = vld [vmem:[%s415 + $0x38] sm:$0xff]
        %v424 = vmul.f32 %v407, %v416
        %v425 = vmul.f32 %v408, %v417
        %v426 = vmul.f32 %v409, %v418
        %v427 = vmul.f32 %v410, %v419
        %v428 = vmul.f32 %v411, %v420
        %v429 = vmul.f32 %v412, %v421
        %v430 = vmul.f32 %v413, %v422
        %v431 = vmul.f32 %v414, %v423
        %432 = vrot.lane.b32.xlu0 %v407, 17
        %v433 = vpop.permute.xlu0 %432
        %434 = vrot.lane.b32.xlu0 %v409, 17
        %v435 = vpop.permute.xlu0 %434
        %436 = vrot.lane.b32.xlu0 %v411, 17
        %v437 = vpop.permute.xlu0 %436
        %438 = vrot.lane.b32.xlu0 %v413, 17
        %v439 = vpop.permute.xlu0 %438
        %440 = vrot.lane.b32.xlu0 %v408, 17
        %v441 = vpop.permute.xlu0 %440
        %442 = vrot.lane.b32.xlu0 %v410, 17
        %v443 = vpop.permute.xlu0 %442
        %444 = vrot.lane.b32.xlu0 %v412, 17
        %v445 = vpop.permute.xlu0 %444
        %446 = vrot.lane.b32.xlu0 %v414, 17
        %v447 = vpop.permute.xlu0 %446
        %v448 = vlaneseq
        %v449 = vand.u32 %v448, 127
        %vm450 = vcmp.lt.s32.totalorder %v449, 17
        %v451 = vsel %vm450, %v433, %v441
        %v452 = vsel %vm450, %v435, %v443
        %v453 = vsel %vm450, %v437, %v445
        %v454 = vsel %vm450, %v439, %v447
        %v455 = vsel %vm450, %v441, %v433
        %v456 = vsel %vm450, %v443, %v435
        %v457 = vsel %vm450, %v445, %v437
        %v458 = vsel %vm450, %v447, %v439
        %v459 = vld [vmem:[#allocation2] sm:$0xff]
        %v460 = vld [vmem:[#allocation2 + $0x8] sm:$0xff]
        %v461 = vld [vmem:[#allocation2 + $0x10] sm:$0xff]
        %v462 = vld [vmem:[#allocation2 + $0x18] sm:$0xff]
        %v463 = vld [vmem:[#allocation2 + $0x20] sm:$0xff]
        %v464 = vld [vmem:[#allocation2 + $0x28] sm:$0xff]
        %v465 = vld [vmem:[#allocation2 + $0x30] sm:$0xff]
        %v466 = vld [vmem:[#allocation2 + $0x38] sm:$0xff]
        %v467 = vmul.f32 %v455, %v459
        %v468 = vmul.f32 %v451, %v460
        %v469 = vmul.f32 %v456, %v461
        %v470 = vmul.f32 %v452, %v462
        %v471 = vmul.f32 %v457, %v463
        %v472 = vmul.f32 %v453, %v464
        %v473 = vmul.f32 %v458, %v465
        %v474 = vmul.f32 %v454, %v466
        %v475 = vadd.f32 %v424, %v467
        %v476 = vadd.f32 %v425, %v468
        %v477 = vadd.f32 %v426, %v469
        %v478 = vadd.f32 %v427, %v470
        %v479 = vadd.f32 %v428, %v471
        %v480 = vadd.f32 %v429, %v472
        %v481 = vadd.f32 %v430, %v473
        %v482 = vadd.f32 %v431, %v474
        %483 = vrot.lane.b32.xlu0 %v407, 16
        %v484 = vpop.permute.xlu0 %483
        %485 = vrot.lane.b32.xlu0 %v409, 16
        %v486 = vpop.permute.xlu0 %485
        %487 = vrot.lane.b32.xlu0 %v411, 16
        %v488 = vpop.permute.xlu0 %487
        %489 = vrot.lane.b32.xlu0 %v413, 16
        %v490 = vpop.permute.xlu0 %489
        %491 = vrot.lane.b32.xlu0 %v408, 16
        %v492 = vpop.permute.xlu0 %491
        %493 = vrot.lane.b32.xlu0 %v410, 16
        %v494 = vpop.permute.xlu0 %493
        %495 = vrot.lane.b32.xlu0 %v412, 16
        %v496 = vpop.permute.xlu0 %495
        %497 = vrot.lane.b32.xlu0 %v414, 16
        %v498 = vpop.permute.xlu0 %497
        %vm499 = vcmp.lt.s32.totalorder %v449, 16
        %v500 = vsel %vm499, %v484, %v492
        %v501 = vsel %vm499, %v486, %v494
        %v502 = vsel %vm499, %v488, %v496
        %v503 = vsel %vm499, %v490, %v498
        %v504 = vsel %vm499, %v492, %v484
        %v505 = vsel %vm499, %v494, %v486
        %v506 = vsel %vm499, %v496, %v488
        %v507 = vsel %vm499, %v498, %v490
        %s508 = scalar_lea.vmem [#allocation2], 64
        %v509 = vld [vmem:[%s508] sm:$0xff]
        %v510 = vld [vmem:[%s508 + $0x8] sm:$0xff]
        %v511 = vld [vmem:[%s508 + $0x10] sm:$0xff]
        %v512 = vld [vmem:[%s508 + $0x18] sm:$0xff]
        %v513 = vld [vmem:[%s508 + $0x20] sm:$0xff]
        %v514 = vld [vmem:[%s508 + $0x28] sm:$0xff]
        %v515 = vld [vmem:[%s508 + $0x30] sm:$0xff]
        %v516 = vld [vmem:[%s508 + $0x38] sm:$0xff]
        %v517 = vmul.f32 %v504, %v509
        %v518 = vmul.f32 %v500, %v510
        %v519 = vmul.f32 %v505, %v511
        %v520 = vmul.f32 %v501, %v512
        %v521 = vmul.f32 %v506, %v513
        %v522 = vmul.f32 %v502, %v514
        %v523 = vmul.f32 %v507, %v515
        %v524 = vmul.f32 %v503, %v516
        %v525 = vadd.f32 %v475, %v517
        %v526 = vadd.f32 %v476, %v518
        %v527 = vadd.f32 %v477, %v519
        %v528 = vadd.f32 %v478, %v520
        %v529 = vadd.f32 %v479, %v521
        %v530 = vadd.f32 %v480, %v522
        %v531 = vadd.f32 %v481, %v523
        %v532 = vadd.f32 %v482, %v524
        %533 = vrot.lane.b32.xlu0 %v407, 15
        %v534 = vpop.permute.xlu0 %533
        %535 = vrot.lane.b32.xlu0 %v409, 15
        %v536 = vpop.permute.xlu0 %535
        %537 = vrot.lane.b32.xlu0 %v411, 15
        %v538 = vpop.permute.xlu0 %537
        %539 = vrot.lane.b32.xlu0 %v413, 15
        %v540 = vpop.permute.xlu0 %539
        %541 = vrot.lane.b32.xlu0 %v408, 15
        %v542 = vpop.permute.xlu0 %541
        %543 = vrot.lane.b32.xlu0 %v410, 15
        %v544 = vpop.permute.xlu0 %543
        %545 = vrot.lane.b32.xlu0 %v412, 15
        %v546 = vpop.permute.xlu0 %545
        %547 = vrot.lane.b32.xlu0 %v414, 15
        %v548 = vpop.permute.xlu0 %547
        %vm549 = vcmp.lt.s32.totalorder %v449, 15
        %v550 = vsel %vm549, %v534, %v542
        %v551 = vsel %vm549, %v536, %v544
        %v552 = vsel %vm549, %v538, %v546
        %v553 = vsel %vm549, %v540, %v548
        %v554 = vsel %vm549, %v542, %v534
        %v555 = vsel %vm549, %v544, %v536
        %v556 = vsel %vm549, %v546, %v538
        %v557 = vsel %vm549, %v548, %v540
        %s558 = scalar_lea.vmem [#allocation2], 128
        %v559 = vld [vmem:[%s558] sm:$0xff]
        %v560 = vld [vmem:[%s558 + $0x8] sm:$0xff]
        %v561 = vld [vmem:[%s558 + $0x10] sm:$0xff]
        %v562 = vld [vmem:[%s558 + $0x18] sm:$0xff]
        %v563 = vld [vmem:[%s558 + $0x20] sm:$0xff]
        %v564 = vld [vmem:[%s558 + $0x28] sm:$0xff]
        %v565 = vld [vmem:[%s558 + $0x30] sm:$0xff]
        %v566 = vld [vmem:[%s558 + $0x38] sm:$0xff]
        %v567 = vmul.f32 %v554, %v559
        %v568 = vmul.f32 %v550, %v560
        %v569 = vmul.f32 %v555, %v561
        %v570 = vmul.f32 %v551, %v562
        %v571 = vmul.f32 %v556, %v563
        %v572 = vmul.f32 %v552, %v564
        %v573 = vmul.f32 %v557, %v565
        %v574 = vmul.f32 %v553, %v566
        %v575 = vadd.f32 %v525, %v567
        %v576 = vadd.f32 %v526, %v568
        %v577 = vadd.f32 %v527, %v569
        %v578 = vadd.f32 %v528, %v570
        %v579 = vadd.f32 %v529, %v571
        %v580 = vadd.f32 %v530, %v572
        %v581 = vadd.f32 %v531, %v573
        %v582 = vadd.f32 %v532, %v574
        %583 = vrot.lane.b32.xlu0 %v407, 1
        %v584 = vpop.permute.xlu0 %583
        %585 = vrot.lane.b32.xlu0 %v409, 1
        %v586 = vpop.permute.xlu0 %585
        %587 = vrot.lane.b32.xlu0 %v411, 1
        %v588 = vpop.permute.xlu0 %587
        %589 = vrot.lane.b32.xlu0 %v413, 1
        %v590 = vpop.permute.xlu0 %589
        %591 = vrot.lane.b32.xlu0 %v408, 1
        %v592 = vpop.permute.xlu0 %591
        %593 = vrot.lane.b32.xlu0 %v410, 1
        %v594 = vpop.permute.xlu0 %593
        %595 = vrot.lane.b32.xlu0 %v412, 1
        %v596 = vpop.permute.xlu0 %595
        %597 = vrot.lane.b32.xlu0 %v414, 1
        %v598 = vpop.permute.xlu0 %597
        %vm599 = vcmp.lt.s32.totalorder %v449, 1
        %v600 = vsel %vm599, %v584, %v592
        %v601 = vsel %vm599, %v586, %v594
        %v602 = vsel %vm599, %v588, %v596
        %v603 = vsel %vm599, %v590, %v598
        %v604 = vsel %vm599, %v592, %v584
        %v605 = vsel %vm599, %v594, %v586
        %v606 = vsel %vm599, %v596, %v588
        %v607 = vsel %vm599, %v598, %v590
        %s608 = scalar_lea.vmem [#allocation2], 192
        %v609 = vld [vmem:[%s608] sm:$0xff]
        %v610 = vld [vmem:[%s608 + $0x8] sm:$0xff]
        %v611 = vld [vmem:[%s608 + $0x10] sm:$0xff]
        %v612 = vld [vmem:[%s608 + $0x18] sm:$0xff]
        %v613 = vld [vmem:[%s608 + $0x20] sm:$0xff]
        %v614 = vld [vmem:[%s608 + $0x28] sm:$0xff]
        %v615 = vld [vmem:[%s608 + $0x30] sm:$0xff]
        %v616 = vld [vmem:[%s608 + $0x38] sm:$0xff]
        %v617 = vmul.f32 %v604, %v609
        %v618 = vmul.f32 %v600, %v610
        %v619 = vmul.f32 %v605, %v611
        %v620 = vmul.f32 %v601, %v612
        %v621 = vmul.f32 %v606, %v613
        %v622 = vmul.f32 %v602, %v614
        %v623 = vmul.f32 %v607, %v615
        %v624 = vmul.f32 %v603, %v616
        %v625 = vadd.f32 %v575, %v617
        %v626 = vadd.f32 %v576, %v618
        %v627 = vadd.f32 %v577, %v619
        %v628 = vadd.f32 %v578, %v620
        %v629 = vadd.f32 %v579, %v621
        %v630 = vadd.f32 %v580, %v622
        %v631 = vadd.f32 %v581, %v623
        %v632 = vadd.f32 %v582, %v624
        %633 = vrot.lane.b32.xlu0 %v407, 127
        %v634 = vpop.permute.xlu0 %633
        %635 = vrot.lane.b32.xlu0 %v409, 127
        %v636 = vpop.permute.xlu0 %635
        %637 = vrot.lane.b32.xlu0 %v411, 127
        %v638 = vpop.permute.xlu0 %637
        %639 = vrot.lane.b32.xlu0 %v413, 127
        %v640 = vpop.permute.xlu0 %639
        %641 = vrot.lane.b32.xlu0 %v408, 127
        %v642 = vpop.permute.xlu0 %641
        %643 = vrot.lane.b32.xlu0 %v410, 127
        %v644 = vpop.permute.xlu0 %643
        %645 = vrot.lane.b32.xlu0 %v412, 127
        %v646 = vpop.permute.xlu0 %645
        %647 = vrot.lane.b32.xlu0 %v414, 127
        %v648 = vpop.permute.xlu0 %647
        %vm649 = vcmp.lt.s32.totalorder %v449, 127
        %v650 = vsel %vm649, %v634, %v642
        %v651 = vsel %vm649, %v636, %v644
        %v652 = vsel %vm649, %v638, %v646
        %v653 = vsel %vm649, %v640, %v648
        %v654 = vsel %vm649, %v642, %v634
        %v655 = vsel %vm649, %v644, %v636
        %v656 = vsel %vm649, %v646, %v638
        %v657 = vsel %vm649, %v648, %v640
        %s658 = scalar_lea.vmem [#allocation2], 320
        %v659 = vld [vmem:[%s658] sm:$0xff]
        %v660 = vld [vmem:[%s658 + $0x8] sm:$0xff]
        %v661 = vld [vmem:[%s658 + $0x10] sm:$0xff]
        %v662 = vld [vmem:[%s658 + $0x18] sm:$0xff]
        %v663 = vld [vmem:[%s658 + $0x20] sm:$0xff]
        %v664 = vld [vmem:[%s658 + $0x28] sm:$0xff]
        %v665 = vld [vmem:[%s658 + $0x30] sm:$0xff]
        %v666 = vld [vmem:[%s658 + $0x38] sm:$0xff]
        %v667 = vmul.f32 %v650, %v659
        %v668 = vmul.f32 %v654, %v660
        %v669 = vmul.f32 %v651, %v661
        %v670 = vmul.f32 %v655, %v662
        %v671 = vmul.f32 %v652, %v663
        %v672 = vmul.f32 %v656, %v664
        %v673 = vmul.f32 %v653, %v665
        %v674 = vmul.f32 %v657, %v666
        %v675 = vadd.f32 %v625, %v667
        %v676 = vadd.f32 %v626, %v668
        %v677 = vadd.f32 %v627, %v669
        %v678 = vadd.f32 %v628, %v670
        %v679 = vadd.f32 %v629, %v671
        %v680 = vadd.f32 %v630, %v672
        %v681 = vadd.f32 %v631, %v673
        %v682 = vadd.f32 %v632, %v674
        %683 = vrot.lane.b32.xlu0 %v407, 113
        %v684 = vpop.permute.xlu0 %683
        %685 = vrot.lane.b32.xlu0 %v409, 113
        %v686 = vpop.permute.xlu0 %685
        %687 = vrot.lane.b32.xlu0 %v411, 113
        %v688 = vpop.permute.xlu0 %687
        %689 = vrot.lane.b32.xlu0 %v413, 113
        %v690 = vpop.permute.xlu0 %689
        %691 = vrot.lane.b32.xlu0 %v408, 113
        %v692 = vpop.permute.xlu0 %691
        %693 = vrot.lane.b32.xlu0 %v410, 113
        %v694 = vpop.permute.xlu0 %693
        %695 = vrot.lane.b32.xlu0 %v412, 113
        %v696 = vpop.permute.xlu0 %695
        %697 = vrot.lane.b32.xlu0 %v414, 113
        %v698 = vpop.permute.xlu0 %697
        %vm699 = vcmp.lt.s32.totalorder %v449, 113
        %v700 = vsel %vm699, %v684, %v692
        %v701 = vsel %vm699, %v686, %v694
        %v702 = vsel %vm699, %v688, %v696
        %v703 = vsel %vm699, %v690, %v698
        %v704 = vsel %vm699, %v692, %v684
        %v705 = vsel %vm699, %v694, %v686
        %v706 = vsel %vm699, %v696, %v688
        %v707 = vsel %vm699, %v698, %v690
        %s708 = scalar_lea.vmem [#allocation2], 384
        %v709 = vld [vmem:[%s708] sm:$0xff]
        %v710 = vld [vmem:[%s708 + $0x8] sm:$0xff]
        %v711 = vld [vmem:[%s708 + $0x10] sm:$0xff]
        %v712 = vld [vmem:[%s708 + $0x18] sm:$0xff]
        %v713 = vld [vmem:[%s708 + $0x20] sm:$0xff]
        %v714 = vld [vmem:[%s708 + $0x28] sm:$0xff]
        %v715 = vld [vmem:[%s708 + $0x30] sm:$0xff]
        %v716 = vld [vmem:[%s708 + $0x38] sm:$0xff]
        %v717 = vmul.f32 %v700, %v709
        %v718 = vmul.f32 %v704, %v710
        %v719 = vmul.f32 %v701, %v711
        %v720 = vmul.f32 %v705, %v712
        %v721 = vmul.f32 %v702, %v713
        %v722 = vmul.f32 %v706, %v714
        %v723 = vmul.f32 %v703, %v715
        %v724 = vmul.f32 %v707, %v716
        %v725 = vadd.f32 %v675, %v717
        %v726 = vadd.f32 %v676, %v718
        %v727 = vadd.f32 %v677, %v719
        %v728 = vadd.f32 %v678, %v720
        %v729 = vadd.f32 %v679, %v721
        %v730 = vadd.f32 %v680, %v722
        %v731 = vadd.f32 %v681, %v723
        %v732 = vadd.f32 %v682, %v724
        %733 = vrot.lane.b32.xlu0 %v407, 112
        %v734 = vpop.permute.xlu0 %733
        %735 = vrot.lane.b32.xlu0 %v409, 112
        %v736 = vpop.permute.xlu0 %735
        %737 = vrot.lane.b32.xlu0 %v411, 112
        %v738 = vpop.permute.xlu0 %737
        %739 = vrot.lane.b32.xlu0 %v413, 112
        %v740 = vpop.permute.xlu0 %739
        %741 = vrot.lane.b32.xlu0 %v408, 112
        %v742 = vpop.permute.xlu0 %741
        %743 = vrot.lane.b32.xlu0 %v410, 112
        %v744 = vpop.permute.xlu0 %743
        %745 = vrot.lane.b32.xlu0 %v412, 112
        %v746 = vpop.permute.xlu0 %745
        %747 = vrot.lane.b32.xlu0 %v414, 112
        %v748 = vpop.permute.xlu0 %747
        %vm749 = vcmp.lt.s32.totalorder %v449, 112
        %v750 = vsel %vm749, %v734, %v742
        %v751 = vsel %vm749, %v736, %v744
        %v752 = vsel %vm749, %v738, %v746
        %v753 = vsel %vm749, %v740, %v748
        %v754 = vsel %vm749, %v742, %v734
        %v755 = vsel %vm749, %v744, %v736
        %v756 = vsel %vm749, %v746, %v738
        %v757 = vsel %vm749, %v748, %v740
        %s758 = scalar_lea.vmem [#allocation2], 448
        %v759 = vld [vmem:[%s758] sm:$0xff]
        %v760 = vld [vmem:[%s758 + $0x8] sm:$0xff]
        %v761 = vld [vmem:[%s758 + $0x10] sm:$0xff]
        %v762 = vld [vmem:[%s758 + $0x18] sm:$0xff]
        %v763 = vld [vmem:[%s758 + $0x20] sm:$0xff]
        %v764 = vld [vmem:[%s758 + $0x28] sm:$0xff]
        %v765 = vld [vmem:[%s758 + $0x30] sm:$0xff]
        %v766 = vld [vmem:[%s758 + $0x38] sm:$0xff]
        %v767 = vmul.f32 %v750, %v759
        %v768 = vmul.f32 %v754, %v760
        %v769 = vmul.f32 %v751, %v761
        %v770 = vmul.f32 %v755, %v762
        %v771 = vmul.f32 %v752, %v763
        %v772 = vmul.f32 %v756, %v764
        %v773 = vmul.f32 %v753, %v765
        %v774 = vmul.f32 %v757, %v766
        %v775 = vadd.f32 %v725, %v767
        %v776 = vadd.f32 %v726, %v768
        %v777 = vadd.f32 %v727, %v769
        %v778 = vadd.f32 %v728, %v770
        %v779 = vadd.f32 %v729, %v771
        %v780 = vadd.f32 %v730, %v772
        %v781 = vadd.f32 %v731, %v773
        %v782 = vadd.f32 %v732, %v774
        %783 = vrot.lane.b32.xlu0 %v407, 111
        %v784 = vpop.permute.xlu0 %783
        %785 = vrot.lane.b32.xlu0 %v409, 111
        %v786 = vpop.permute.xlu0 %785
        %787 = vrot.lane.b32.xlu0 %v411, 111
        %v788 = vpop.permute.xlu0 %787
        %789 = vrot.lane.b32.xlu0 %v413, 111
        %v790 = vpop.permute.xlu0 %789
        %791 = vrot.lane.b32.xlu0 %v408, 111
        %v792 = vpop.permute.xlu0 %791
        %793 = vrot.lane.b32.xlu0 %v410, 111
        %v794 = vpop.permute.xlu0 %793
        %795 = vrot.lane.b32.xlu0 %v412, 111
        %v796 = vpop.permute.xlu0 %795
        %797 = vrot.lane.b32.xlu0 %v414, 111
        %v798 = vpop.permute.xlu0 %797
        %vm799 = vcmp.lt.s32.totalorder %v449, 111
        %v800 = vsel %vm799, %v784, %v792
        %v801 = vsel %vm799, %v786, %v794
        %v802 = vsel %vm799, %v788, %v796
        %v803 = vsel %vm799, %v790, %v798
        %v804 = vsel %vm799, %v792, %v784
        %v805 = vsel %vm799, %v794, %v786
        %v806 = vsel %vm799, %v796, %v788
        %v807 = vsel %vm799, %v798, %v790
        %s808 = scalar_lea.vmem [#allocation2], 512
        %v809 = vld [vmem:[%s808] sm:$0xff]
        %v810 = vld [vmem:[%s808 + $0x8] sm:$0xff]
        %v811 = vld [vmem:[%s808 + $0x10] sm:$0xff]
        %v812 = vld [vmem:[%s808 + $0x18] sm:$0xff]
        %v813 = vld [vmem:[%s808 + $0x20] sm:$0xff]
        %v814 = vld [vmem:[%s808 + $0x28] sm:$0xff]
        %v815 = vld [vmem:[%s808 + $0x30] sm:$0xff]
        %v816 = vld [vmem:[%s808 + $0x38] sm:$0xff]
        %v817 = vmul.f32 %v800, %v809
        %v818 = vmul.f32 %v804, %v810
        %v819 = vmul.f32 %v801, %v811
        %v820 = vmul.f32 %v805, %v812
        %v821 = vmul.f32 %v802, %v813
        %v822 = vmul.f32 %v806, %v814
        %v823 = vmul.f32 %v803, %v815
        %v824 = vmul.f32 %v807, %v816
        %v825 = vadd.f32 %v775, %v817
        %v826 = vadd.f32 %v776, %v818
        %v827 = vadd.f32 %v777, %v819
        %v828 = vadd.f32 %v778, %v820
        %v829 = vadd.f32 %v779, %v821
        %v830 = vadd.f32 %v780, %v822
        %v831 = vadd.f32 %v781, %v823
        %v832 = vadd.f32 %v782, %v824
        %833 = vset.pattern.permute.xlu0 1
        %834 = vperm.xlu0 %833, %v271
        %v835 = vpop.permute.xlu0 %834
        %837 = vset.pattern.permute.xlu0 1
        %838 = vperm.xlu0 %837, %v272
        %v839 = vpop.permute.xlu0 %838
        %841 = vset.pattern.permute.xlu0 1
        %842 = vperm.xlu0 %841, %v273
        %v843 = vpop.permute.xlu0 %842
        %845 = vset.pattern.permute.xlu0 1
        %846 = vperm.xlu0 %845, %v274
        %v847 = vpop.permute.xlu0 %846
        %v849 = vadd.f32 %v825, %v835
        %v850 = vadd.f32 %v826, %v835
        %v851 = vadd.f32 %v827, %v839
        %v852 = vadd.f32 %v828, %v839
        %v853 = vadd.f32 %v829, %v843
        %v854 = vadd.f32 %v830, %v843
        %v855 = vadd.f32 %v831, %v847
        %v856 = vadd.f32 %v832, %v847
        %v857 = vmax.f32 %v849, 0.0
        %v858 = vmax.f32 %v850, 0.0
        %v859 = vmax.f32 %v851, 0.0
        %v860 = vmax.f32 %v852, 0.0
        %v861 = vmax.f32 %v853, 0.0
        %v862 = vmax.f32 %v854, 0.0
        %v863 = vmax.f32 %v855, 0.0
        %v864 = vmax.f32 %v856, 0.0
        %v865 = vmin.f32 %v857, 6.0
        %v866 = vmin.f32 %v858, 6.0
        %v867 = vmin.f32 %v859, 6.0
        %v868 = vmin.f32 %v860, 6.0
        %v869 = vmin.f32 %v861, 6.0
        %v870 = vmin.f32 %v862, 6.0
        %v871 = vmin.f32 %v863, 6.0
        %v872 = vmin.f32 %v864, 6.0
        %874 = vset.pattern.permute.xlu0 0
        %875 = vperm.xlu0 %874, %v276
        %v876 = vpop.permute.xlu0 %875
        %vm878 = vcmask 261120
        %v880 = vsel %vm878, %v275, 0
        %882 = vmatprep.subr.mxu0 %v866
        %883 = vmatpush1.msra.mxu0 %v865
        %884 = vmatprep.subr.mxu0 %v868
        %885 = vmatpush1.msra.mxu0 %v867
        %886 = vmatprep.subr.mxu0 %v870
        %887 = vmatpush1.msra.mxu0 %v869
        %888 = vmatprep.subr.mxu0 %v872
        %889 = vmatpush1.msra.mxu0 %v871
        %890 = vmatprep.subr.mxu0 0.0
        %891 = vmatpush1.msra.mxu0 0.0
        %892 = vmatprep.subr.mxu0 0.0
        %893 = vmatpush1.msra.mxu0 0.0
        %894 = vmatprep.subr.mxu0 0.0
        %895 = vmatpush1.msra.mxu0 0.0
        %896 = vmatprep.subr.mxu0 0.0
        %897 = vmatpush1.msra.mxu0 0.0
        %898 = vmatprep.subr.mxu0 0.0
        %899 = vmatpush1.msra.mxu0 0.0
        %900 = vmatprep.subr.mxu0 0.0
        %901 = vmatpush1.msra.mxu0 0.0
        %902 = vmatprep.subr.mxu0 0.0
        %903 = vmatpush1.msra.mxu0 0.0
        %904 = vmatprep.subr.mxu0 0.0
        %905 = vmatpush1.msra.mxu0 0.0
        %906 = vmatprep.subr.mxu0 0.0
        %907 = vmatpush1.msra.mxu0 0.0
        %908 = vmatprep.subr.mxu0 0.0
        %909 = vmatpush1.msra.mxu0 0.0
        %910 = vmatprep.subr.mxu0 0.0
        %911 = vmatpush1.msra.mxu0 0.0
        %912 = vmatprep.subr.mxu0 0.0
        %913 = vmatpush1.msra.mxu0 0.0
        %914 = vmatprep.subr.mxu0 0.0
        %915 = vmatpush1.msra.mxu0 0.0
        %916 = vmatprep.subr.mxu0 0.0
        %917 = vmatpush1.msra.mxu0 0.0
        %918 = vmatprep.subr.mxu0 0.0
        %919 = vmatpush1.msra.mxu0 0.0
        %920 = vmatprep.subr.mxu0 0.0
        %921 = vmatpush1.msra.mxu0 0.0
        %922 = vmatprep.subr.mxu0 0.0
        %923 = vmatpush1.msra.mxu0 0.0
        %924 = vmatprep.subr.mxu0 0.0
        %925 = vmatpush1.msra.mxu0 0.0
        %926 = vmatprep.subr.mxu0 0.0
        %927 = vmatpush1.msra.mxu0 0.0
        %928 = vmatprep.subr.mxu0 0.0
        %929 = vmatpush1.msra.mxu0 0.0
        %930 = vmatprep.subr.mxu0 0.0
        %931 = vmatpush1.msra.mxu0 0.0
        %932 = vmatprep.subr.mxu0 0.0
        %933 = vmatpush1.msra.mxu0 0.0
        %934 = vmatprep.subr.mxu0 0.0
        %935 = vmatpush1.msra.mxu0 0.0
        %936 = vmatprep.subr.mxu0 0.0
        %937 = vmatpush1.msra.mxu0 0.0
        %938 = vmatprep.subr.mxu0 0.0
        %939 = vmatpush1.msra.mxu0 0.0
        %940 = vmatprep.subr.mxu0 0.0
        %941 = vmatpush1.msra.mxu0 0.0
        %942 = vmatprep.subr.mxu0 0.0
        %943 = vmatpush1.msra.mxu0 0.0
        %944 = vmatprep.subr.mxu0 0.0
        %945 = vmatpush1.msra.mxu0 0.0
        %946 = vmatprep.mubr.f32.mxu0 0.0
        %947 = vmatmul.mubr.f32.gmra.mrb[0].mxu0 %v880
        %v948 = vpop.f32.mrb[0].mxu0
        %v949 = vadd.f32 %v876, %v948
        %v950 = vpop.f32.mrb[0].mxu0
        %v951 = vadd.f32 %v876, %v950
        %952 = vdwg.mxu0
        %v953 = vadd.f32 %v949, %v265
        %v954 = vadd.f32 %v951, %v266
        %955 = vst [vmem:[%s259] sm:$0xff] %v953
        %956 = vst [vmem:[%s259 + $0x8] sm:$0xff] %v954
        %s957 = sand.u32 %s160, 1
        %s958 = scalar_lea.sflag [#allocation4], %s957
        %s959 = sand.u32 %s160, 1
        %s960 = smul.addr %s959, 16
        %s961 = scalar_lea.vmem [#allocation5], %s960
        // Predicated region
        $region49: #{tpu_custom_call.1} parent=43 // pred_check
          %p962 = pneg %p170
        $region50: #{tpu_custom_call.1} parent=43 // pred_check_branch
          %964 = sbr.rel (%p962) target = $region52
        $region51: #{tpu_custom_call.1} parent=43 // pred_region
          %s966 = ssub.s32 256, 256
          %967 = vsyncadd %s958, %s966
          %s968 = smul.addr %s21, 2
          %s969 = smul.addr %s968, 128
          %s970 = scalar_lea.hbm %s6, %s969
          %s972 = sshll.u32 %s961, 4
          %s973 = int_to_ptr.vmem [resolvable:$true] %s972
          %975 = dma.vmem_to_hbm [thread:$0]  %s973, 256, %s970, %s958
        $region52: #{tpu_custom_call.1} parent=43 // pred_fallthru
          _
      $region44: #{tpu_custom_call.1} parent=5 // pred_fallthru
        _
      %p976 = scmp.le.s32.totalorder 2, %s16
      // Predicated region
      $region53: #{tpu_custom_call.1} parent=5 // pred_check
        %p977 = pneg %p976
      $region54: #{tpu_custom_call.1} parent=5 // pred_check_branch
        %979 = sbr.rel (%p977) target = $region56
      $region55: #{tpu_custom_call.1} parent=5 // pred_region
        %s980 = ssub.s32 %s16, 2
        // Predicated region
        $region57: #{tpu_custom_call.1} parent=55 // pred_check
          %p981 = pneg %p176
        $region58: #{tpu_custom_call.1} parent=55 // pred_check_branch
          %983 = sbr.rel (%p981) target = $region60
        $region59: #{tpu_custom_call.1} parent=55 // pred_region
          %s984 = sand.u32 %s161, 1
          %s985 = scalar_lea.sflag [#allocation4], %s984
          %s986 = sand.u32 %s161, 1
          %s987 = smul.addr %s986, 16
          %s988 = scalar_lea.vmem [#allocation5], %s987
          %989 = dma.done %s985, 256
        $region60: #{tpu_custom_call.1} parent=55 // pred_fallthru
          _
      $region56: #{tpu_custom_call.1} parent=5 // pred_fallthru
        _
    $region6: #{tpu_custom_call.1} parent=1 // loop_footer
      %s20 = sadd.s32 1, %s16
    $region7: #{tpu_custom_call.1} parent=1 // loop_footer_branch
      %15 = sbr.rel target = $region3
    $region8: #{tpu_custom_call.1} parent=1 // loop_exit
      _
    %990 = vsyncpa [#allocation3], 1
    %s991 = scalar_lea.sflag [#allocation3], 1
    %992 = vsyncpa %s991, 1
    %993 = vsyncpa [#allocation4], 1
    %s994 = scalar_lea.sflag [#allocation4], 1
    %995 = vsyncpa %s994, 1

</llo_original>
